<compile_context>
chip_gen: v7x
topology: tpu7x:2x2x1
jax: 0.10.0
libtpu: 0.0.40
codegen_flags: <defaults>
</compile_context>

<pallas_src>
import functools

import jax
import jax.numpy as jnp
from jax import lax
from jax.experimental import pallas as pl
from jax.experimental.pallas import tpu as pltpu


def _conv3d_down_kernel(x_ref, w_ref, b_ref, o_ref, *, st):
    # x_ref: (1, T_pad, P_blk, 9C)   spatially-im2col'd input (compute dtype)
    # w_ref: (3, 9C, C)              per-kt weight matrices   (compute dtype)
    # b_ref: (1, C)                  bias, f32
    # o_ref: (1, 1, P_blk, C)        output tile
    t0 = pl.program_id(2) * st
    acc = jnp.dot(x_ref[0, t0], w_ref[0], preferred_element_type=jnp.float32)
    acc = acc + jnp.dot(x_ref[0, t0 + 1], w_ref[1],
                        preferred_element_type=jnp.float32)
    acc = acc + jnp.dot(x_ref[0, t0 + 2], w_ref[2],
                        preferred_element_type=jnp.float32)
    acc = acc + b_ref[...]                       # f32 bias, broadcast (1, C)
    o_ref[...] = acc[None, None, :, :].astype(o_ref.dtype)


def _pick_pixel_tile(P, C, T_pad, compute_bytes):
    # f32 accumulator per tile <= ~128 KiB (about half the vreg file)
    cap_acc = max(8, (128 * 1024) // (4 * C))
    # single input block <= ~8 MiB so 2x-buffered input + output + weights
    # fit comfortably inside v7x's 32 MiB scoped VMEM default.
    cap_in = max(8, (8 * 1024 * 1024) // (T_pad * 9 * C * compute_bytes))
    tile = min(P, cap_acc, cap_in)
    if tile < P:
        tile = max(8, (tile // 8) * 8)
    return tile


def downsample3d(x, w, b, *, down_time=False, compute_dtype=jnp.bfloat16):
    """x: (N, C, T, H, W), w: (Cout, Cin, 3, 3, 3), b: (Cout,). Returns NCTHW."""
    N, C, T, H, W = x.shape
    assert H % 2 == 0 and W % 2 == 0
    st = 2 if down_time else 1
    out_dtype = x.dtype
    compute_bytes = jnp.dtype(compute_dtype).itemsize

    # ---- layout plumbing (fused by XLA into one gather pass over x) --------
    # NCTHW -> NTHWC, cast to compute dtype, pad H/W (zeros) and T (replicate).
    xt = jnp.transpose(x, (0, 2, 3, 4, 1)).astype(compute_dtype)   # (N,T,H,W,C)
    xp = jnp.pad(xt, ((0, 0), (0, 0), (0, 1), (0, 1), (0, 0)))
    xp = jnp.pad(xp, ((0, 0), (2, 0), (0, 0), (0, 0), (0, 0)), mode="edge")

    T_pad = T + 2
    T_out = (T_pad - 3) // st + 1
    H_out, W_out = H // 2, W // 2
    P = H_out * W_out

    # Stride-2 spatial im2col: 9 tap views (kh, kw) stacked into the channel
    # dim.  K-ordering is (kh, kw, cin), matching the weight reshape below.
    taps = [xp[:, :, kh:kh + 2 * H_out:2, kw:kw + 2 * W_out:2, :]
            for kh in range(3) for kw in range(3)]
    xcol = jnp.stack(taps, axis=-2).reshape(N, T_pad, P, 9 * C)

    # Weights: (Cout, Cin, kt, kh, kw) -> (kt, kh*kw*Cin, Cout).
    wk = jnp.transpose(w, (2, 3, 4, 1, 0)).reshape(3, 9 * C, C).astype(compute_dtype)
    bk = b.reshape(1, C).astype(jnp.float32)

    P_blk = _pick_pixel_tile(P, C, T_pad, compute_bytes)
    grid = (N, pl.cdiv(P, P_blk), T_out)

    kernel = functools.partial(_conv3d_down_kernel, st=st)

    out = pl.pallas_call(
        kernel,
        out_shape=jax.ShapeDtypeStruct((N, T_out, P, C), out_dtype),
        grid=grid,
        in_specs=[
            # Block index depends only on (n, p): fetched once per pixel tile,
            # reused across the whole (inner) T_out axis.
            pl.BlockSpec((1, T_pad, P_blk, 9 * C), lambda n, p, t: (n, 0, p, 0)),
            pl.BlockSpec((3, 9 * C, C), lambda n, p, t: (0, 0, 0)),
            pl.BlockSpec((1, C), lambda n, p, t: (0, 0)),
        ],
        out_specs=pl.BlockSpec((1, 1, P_blk, C), lambda n, p, t: (n, t, p, 0)),
        compiler_params=pltpu.CompilerParams(
            dimension_semantics=("parallel", "parallel", "parallel")),
    )(xcol, wk, bk)

    # (N, T_out, P, C) -> NCTHW
    out = out.reshape(N, T_out, H_out, W_out, C)
    return jnp.transpose(out, (0, 4, 1, 2, 3))


def _reference(x, w, b, *, down_time=False):
    """Pure-JAX reference mirroring the PyTorch forward exactly (NCTHW, f32)."""
    st = 2 if down_time else 1
    xp = jnp.pad(x, ((0, 0), (0, 0), (0, 0), (0, 1), (0, 1)))
    xp = jnp.pad(xp, ((0, 0), (0, 0), (2, 0), (0, 0), (0, 0)), mode="edge")
    out = lax.conv_general_dilated(
        xp, w, window_strides=(st, 2, 2), padding="VALID",
        dimension_numbers=("NCDHW", "OIDHW", "NCDHW"))
    return out + b.reshape(1, -1, 1, 1, 1)


if __name__ == "__main__":
    key = jax.random.PRNGKey(0)
    kx, kw_, kb = jax.random.split(key, 3)

    N, C, T, H, W = 2, 4, 8, 16, 16
    x = jax.random.normal(kx, (N, C, T, H, W), dtype=jnp.float32)

    # Conv3d(C, C, 3) default-style init, deterministic
    fan_in = C * 3 * 3 * 3
    bound = 1.0 / (fan_in ** 0.5)
    w = jax.random.uniform(kw_, (C, C, 3, 3, 3), jnp.float32, -bound, bound)
    b = jax.random.uniform(kb, (C,), jnp.float32, -bound, bound)

    ok = True
    for down_time in (False, True):
        ref = _reference(x, w, b, down_time=down_time)

        # Exactness check: f32 compute path against f32 reference.
        out = jax.block_until_ready(
            downsample3d(x, w, b, down_time=down_time,
                         compute_dtype=jnp.float32))
        if out.shape != ref.shape or not jnp.allclose(out, ref,
                                                      atol=1e-4, rtol=1e-4):
            ok = False
            print("MISMATCH f32 down_time=", down_time,
                  float(jnp.max(jnp.abs(out - ref))))

        # Production path: bf16 operands on the MXU, f32 accumulation.
        out_bf = jax.block_until_ready(
            downsample3d(x, w, b, down_time=down_time,
                         compute_dtype=jnp.bfloat16))
        if out_bf.shape != ref.shape or not jnp.allclose(out_bf, ref,
                                                         atol=5e-2, rtol=5e-2):
            ok = False
            print("MISMATCH bf16 down_time=", down_time,
                  float(jnp.max(jnp.abs(out_bf - ref))))

    if ok:
        print("KERNEL_OK")
</pallas_src>

<mosaic_0001>
module attributes {stable_mosaic.version = 11 : i64} {
  func.func @_conv3d_down_kernel(%arg0: i32, %arg1: i32, %arg2: i32, %arg3: memref<1x10x64x36xf32, #tpu.memory_space<vmem>>, %arg4: memref<3x36x4xf32, #tpu.memory_space<vmem>>, %arg5: memref<1x4xf32, #tpu.memory_space<vmem>>, %arg6: memref<1x1x64x4xf32, #tpu.memory_space<vmem>>) attributes {dimension_semantics = [#tpu.dimension_semantics<parallel>, #tpu.dimension_semantics<parallel>, #tpu.dimension_semantics<parallel>], iteration_bounds = array<i64: 2, 1, 8>, scalar_prefetch = 0 : i64, scratch_operands = 0 : i64, tpu.core_type = #tpu.core_type<tc>, window_params = [{transform_indices = @transform_0, window_bounds = array<i64: 1, 10, 64, 36>}, {pipeline_mode = #tpu.pipeline_mode<synchronous>, transform_indices = @transform_1, window_bounds = array<i64: 3, 36, 4>}, {pipeline_mode = #tpu.pipeline_mode<synchronous>, transform_indices = @transform_2, window_bounds = array<i64: 1, 4>}, {transform_indices = @transform_3, window_bounds = array<i64: 1, 1, 64, 4>}]} {
    %c1_i32 = arith.constant 1 : i32
    %0 = arith.muli %arg2, %c1_i32 : i32
    %c0 = arith.constant 0 : index
    %1 = arith.index_cast %0 : i32 to index
    %c0_0 = arith.constant 0 : index
    %c0_1 = arith.constant 0 : index
    %2 = vector.load %arg3[%c0, %1, %c0_0, %c0_1] : memref<1x10x64x36xf32, #tpu.memory_space<vmem>>, vector<1x1x64x36xf32>
    %3 = vector.shape_cast %2 : vector<1x1x64x36xf32> to vector<64x36xf32>
    %c0_2 = arith.constant 0 : index
    %c0_3 = arith.constant 0 : index
    %c0_4 = arith.constant 0 : index
    %4 = vector.load %arg4[%c0_2, %c0_3, %c0_4] : memref<3x36x4xf32, #tpu.memory_space<vmem>>, vector<1x36x4xf32>
    %5 = vector.shape_cast %4 : vector<1x36x4xf32> to vector<36x4xf32>
    %cst = arith.constant dense<0.000000e+00> : vector<64x4xf32>
    %6 = tpu.matmul %3, %5, %cst {dimension_numbers = #tpu.dot_dimension_numbers<[1], [0], [0], [1], [0, 0, 1, 1], [], []>} : vector<64x36xf32>, vector<36x4xf32>, vector<64x4xf32> -> vector<64x4xf32>
    %c1_i32_5 = arith.constant 1 : i32
    %7 = arith.addi %0, %c1_i32_5 : i32
    %c0_6 = arith.constant 0 : index
    %8 = arith.index_cast %7 : i32 to index
    %c0_7 = arith.constant 0 : index
    %c0_8 = arith.constant 0 : index
    %9 = vector.load %arg3[%c0_6, %8, %c0_7, %c0_8] : memref<1x10x64x36xf32, #tpu.memory_space<vmem>>, vector<1x1x64x36xf32>
    %10 = vector.shape_cast %9 : vector<1x1x64x36xf32> to vector<64x36xf32>
    %c1 = arith.constant 1 : index
    %c0_9 = arith.constant 0 : index
    %c0_10 = arith.constant 0 : index
    %11 = vector.load %arg4[%c1, %c0_9, %c0_10] : memref<3x36x4xf32, #tpu.memory_space<vmem>>, vector<1x36x4xf32>
    %12 = vector.shape_cast %11 : vector<1x36x4xf32> to vector<36x4xf32>
    %cst_11 = arith.constant dense<0.000000e+00> : vector<64x4xf32>
    %13 = tpu.matmul %10, %12, %cst_11 {dimension_numbers = #tpu.dot_dimension_numbers<[1], [0], [0], [1], [0, 0, 1, 1], [], []>} : vector<64x36xf32>, vector<36x4xf32>, vector<64x4xf32> -> vector<64x4xf32>
    %14 = arith.addf %6, %13 : vector<64x4xf32>
    %c2_i32 = arith.constant 2 : i32
    %15 = arith.addi %0, %c2_i32 : i32
    %c0_12 = arith.constant 0 : index
    %16 = arith.index_cast %15 : i32 to index
    %c0_13 = arith.constant 0 : index
    %c0_14 = arith.constant 0 : index
    %17 = vector.load %arg3[%c0_12, %16, %c0_13, %c0_14] : memref<1x10x64x36xf32, #tpu.memory_space<vmem>>, vector<1x1x64x36xf32>
    %18 = vector.shape_cast %17 : vector<1x1x64x36xf32> to vector<64x36xf32>
    %c2 = arith.constant 2 : index
    %c0_15 = arith.constant 0 : index
    %c0_16 = arith.constant 0 : index
    %19 = vector.load %arg4[%c2, %c0_15, %c0_16] : memref<3x36x4xf32, #tpu.memory_space<vmem>>, vector<1x36x4xf32>
    %20 = vector.shape_cast %19 : vector<1x36x4xf32> to vector<36x4xf32>
    %cst_17 = arith.constant dense<0.000000e+00> : vector<64x4xf32>
    %21 = tpu.matmul %18, %20, %cst_17 {dimension_numbers = #tpu.dot_dimension_numbers<[1], [0], [0], [1], [0, 0, 1, 1], [], []>} : vector<64x36xf32>, vector<36x4xf32>, vector<64x4xf32> -> vector<64x4xf32>
    %22 = arith.addf %14, %21 : vector<64x4xf32>
    %c0_18 = arith.constant 0 : index
    %c0_19 = arith.constant 0 : index
    %23 = vector.load %arg5[%c0_18, %c0_19] : memref<1x4xf32, #tpu.memory_space<vmem>>, vector<1x4xf32>
    %24 = vector.broadcast %23 : vector<1x4xf32> to vector<64x4xf32>
    %25 = arith.addf %22, %24 : vector<64x4xf32>
    %26 = vector.shape_cast %25 : vector<64x4xf32> to vector<1x1x64x4xf32>
    %c0_20 = arith.constant 0 : index
    %c0_21 = arith.constant 0 : index
    %c0_22 = arith.constant 0 : index
    %c0_23 = arith.constant 0 : index
    %27 = vector.load %arg6[%c0_20, %c0_21, %c0_22, %c0_23] : memref<1x1x64x4xf32, #tpu.memory_space<vmem>>, vector<1x1x64x4xf32>
    tpu.vector_store %arg6[%c0_20, %c0_21, %c0_22, %c0_23], %26 {strides = array<i32>} : memref<1x1x64x4xf32, #tpu.memory_space<vmem>>, vector<1x1x64x4xf32>,
    return
  }
  func.func @transform_0(%arg0: i32, %arg1: i32, %arg2: i32) -> (i32, i32, i32, i32) {
    %c0_i32 = arith.constant 0 : i32
    %c0_i32_0 = arith.constant 0 : i32
    %c0_i32_1 = arith.constant 0 : i32
    return %arg0, %c0_i32, %arg1, %c0_i32_0 : i32, i32, i32, i32
  }
  func.func @transform_1(%arg0: i32, %arg1: i32, %arg2: i32) -> (i32, i32, i32) {
    %c0_i32 = arith.constant 0 : i32
    %c0_i32_0 = arith.constant 0 : i32
    %c0_i32_1 = arith.constant 0 : i32
    %c0_i32_2 = arith.constant 0 : i32
    return %c0_i32, %c0_i32_0, %c0_i32_1 : i32, i32, i32
  }
  func.func @transform_2(%arg0: i32, %arg1: i32, %arg2: i32) -> (i32, i32) {
    %c0_i32 = arith.constant 0 : i32
    %c0_i32_0 = arith.constant 0 : i32
    %c0_i32_1 = arith.constant 0 : i32
    return %c0_i32, %c0_i32_0 : i32, i32
  }
  func.func @transform_3(%arg0: i32, %arg1: i32, %arg2: i32) -> (i32, i32, i32, i32) {
    %c0_i32 = arith.constant 0 : i32
    %c0_i32_0 = arith.constant 0 : i32
    return %arg0, %arg2, %arg1, %c0_i32 : i32, i32, i32, i32
  }
}

</mosaic_0001>

<llo_original>
// kernel: tpu_custom_call.1
$region0: #{tpu_custom_call.1}
  #allocation0 [shape = 'u32[]', space=smem, size = 0x4, offset = 0x4, fixed_abs, tag = 'smem constant byte address 0x4 - core index']
  #allocation1 [shape = 'u32[144,128]{1,0:T(1,128)}', space=vmem, size = 0x12000, scoped, tag = 'internal scratch']
  %s0 = inlined_call_operand.vmem [shape: f32[2,10,64,36], index: 0, kind: input, shape index: {}]
  %s1 = inlined_call_operand.vmem [shape: f32[3,36,4], index: 1, kind: input, shape index: {}]
  %s2 = inlined_call_operand.vmem [shape: f32[1,4], index: 2, kind: input, shape index: {}]
  %s3 = inlined_call_operand.vmem [shape: f32[2,8,64,4], index: 3, kind: output, shape index: {}]
  %s4 = sld [smem:[#allocation0]]
  $region45: #{tpu_custom_call.1} parent=0
    _
  %s6 = ssub.s32 1, %s4
  %s7 = scalar_select 0, %s6, %s4
  loop: start=0, step=1, limit=18
  $region2: #{tpu_custom_call.1} parent=0 // loop_pre_header
    _
  $region3: #{tpu_custom_call.1} parent=0 // loop_header
    %s9 = sphi 0, %s13
    %p10 = scmp.ge.s32.totalorder %s9, 18
    %s16 = sphi 0, %s35
    %s17 = sphi 0, %s31
    %s18 = sphi 0, %s27
    %s19 = sphi 0, %s16
    %s20 = sphi 0, %s17
    %s21 = sphi 0, %s18
    %s22 = sphi 0, %s19
    %s23 = sphi 0, %s20
    %s24 = sphi 0, %s21
    %s40 = sphi 0, %s42
    %s43 = sphi 0, %s40
    %s44 = sphi 0, %s43
    %s60 = sphi 0, %s44
    %s64 = sphi 0, %s64
    %s66 = sphi 0, %s64
    %s67 = sphi 0, %s66
    %s81 = sphi 0, %s67
    %s85 = sphi 0, %s85
    %s87 = sphi 0, %s85
    %s88 = sphi 0, %s87
    %s102 = sphi 0, %s88
    %s112 = sphi 0, %s114
    %s115 = sphi 0, %s112
    %s116 = sphi 0, %s115
    %s132 = sphi 0, %s116
  $region4: #{tpu_custom_call.1} parent=0 // loop_header_branch
    %12 = sbr.rel (%p10) target = $region8
  $region5: #{tpu_custom_call.1} parent=0 // loop_body
    %s14 = ssub.s32 %s9, 1
    %s15 = ssub.s32 %s9, 2
    %s25 = sadd.s32 1, %s18
    %p26 = scmp.ge.s32.totalorder %s25, 8
    %s27 = scalar_select %p26, 0, %s25
    %s28 = sadd.s32 1, %s17
    %s29 = scalar_select %p26, %s28, %s17
    %p30 = scmp.ge.s32.totalorder %s29, 1
    %s31 = scalar_select %p30, 0, %s29
    %s32 = sadd.s32 1, %s16
    %s33 = scalar_select %p30, %s32, %s16
    %p34 = scmp.ge.s32.totalorder %s33, 2
    %s35 = scalar_select %p34, 0, %s33
    %s36 = ssub.s32 %s16, %s35
    %s37 = ssub.s32 %s17, %s31
    %s38 = sor.u32 %s36, %s37
    %p39 = scmp.eq.s32.totalorder %s38, 0
    %s41 = sadd.s32 %s40, 1
    %s42 = scalar_select %p39, %s40, %s41
    %p45 = pneg %p39
    %p46 = scmp.eq.s32.totalorder %s9, 15
    %p47 = por %p45, %p46
    %p48 = scmp.ne.s32.totalorder %s40, %s43
    %p49 = scmp.eq.s32.totalorder %s9, 0
    %p50 = por %p48, %p49
    %p51 = scmp.ne.s32.totalorder %s40, %s43
    %p52 = scmp.eq.s32.totalorder %s14, 15
    %p53 = por %p51, %p52
    %p54 = scmp.ne.s32.totalorder %s43, %s44
    %p55 = scmp.eq.s32.totalorder %s14, 0
    %p56 = por %p54, %p55
    %p57 = scmp.ne.s32.totalorder %s43, %s44
    %p58 = scmp.eq.s32.totalorder %s15, 15
    %p59 = por %p57, %p58
    %p61 = scmp.ne.s32.totalorder %s44, %s60
    %p62 = scmp.eq.s32.totalorder %s15, 0
    %p63 = por %p61, %p62
    %s65 = sadd.s32 %s64, 1
    %p68 = scmp.eq.s32.totalorder %s9, 15
    %p69 = scmp.ne.s32.totalorder %s64, %s66
    %p70 = scmp.eq.s32.totalorder %s9, 0
    %p71 = por %p69, %p70
    %p72 = scmp.ne.s32.totalorder %s64, %s66
    %p73 = scmp.eq.s32.totalorder %s14, 15
    %p74 = por %p72, %p73
    %p75 = scmp.ne.s32.totalorder %s66, %s67
    %p76 = scmp.eq.s32.totalorder %s14, 0
    %p77 = por %p75, %p76
    %p78 = scmp.ne.s32.totalorder %s66, %s67
    %p79 = scmp.eq.s32.totalorder %s15, 15
    %p80 = por %p78, %p79
    %p82 = scmp.ne.s32.totalorder %s67, %s81
    %p83 = scmp.eq.s32.totalorder %s15, 0
    %p84 = por %p82, %p83
    %s86 = sadd.s32 %s85, 1
    %p89 = scmp.eq.s32.totalorder %s9, 15
    %p90 = scmp.ne.s32.totalorder %s85, %s87
    %p91 = scmp.eq.s32.totalorder %s9, 0
    %p92 = por %p90, %p91
    %p93 = scmp.ne.s32.totalorder %s85, %s87
    %p94 = scmp.eq.s32.totalorder %s14, 15
    %p95 = por %p93, %p94
    %p96 = scmp.ne.s32.totalorder %s87, %s88
    %p97 = scmp.eq.s32.totalorder %s14, 0
    %p98 = por %p96, %p97
    %p99 = scmp.ne.s32.totalorder %s87, %s88
    %p100 = scmp.eq.s32.totalorder %s15, 15
    %p101 = por %p99, %p100
    %p103 = scmp.ne.s32.totalorder %s88, %s102
    %p104 = scmp.eq.s32.totalorder %s15, 0
    %p105 = por %p103, %p104
    %s106 = ssub.s32 %s16, %s35
    %s107 = ssub.s32 %s18, %s27
    %s108 = sor.u32 %s106, %s107
    %s109 = ssub.s32 %s17, %s31
    %s110 = sor.u32 %s108, %s109
    %p111 = scmp.eq.s32.totalorder %s110, 0
    %s113 = sadd.s32 %s112, 1
    %s114 = scalar_select %p111, %s112, %s113
    %p117 = pneg %p111
    %p118 = scmp.eq.s32.totalorder %s9, 15
    %p119 = por %p117, %p118
    %p120 = scmp.ne.s32.totalorder %s112, %s115
    %p121 = scmp.eq.s32.totalorder %s9, 0
    %p122 = por %p120, %p121
    %p123 = scmp.ne.s32.totalorder %s112, %s115
    %p124 = scmp.eq.s32.totalorder %s14, 15
    %p125 = por %p123, %p124
    %p126 = scmp.ne.s32.totalorder %s115, %s116
    %p127 = scmp.eq.s32.totalorder %s14, 0
    %p128 = por %p126, %p127
    %p129 = scmp.ne.s32.totalorder %s115, %s116
    %p130 = scmp.eq.s32.totalorder %s15, 15
    %p131 = por %p129, %p130
    %p133 = scmp.ne.s32.totalorder %s116, %s132
    %p134 = scmp.eq.s32.totalorder %s15, 0
    %p135 = por %p133, %p134
    %p136 = scmp.le.s32.totalorder 1, %s9
    %p137 = scmp.lt.s32.totalorder %s9, 17
    %p138 = pnand %p136, %p137
    %p139 = pneg %p138
    // Predicated region
    $region9: #{tpu_custom_call.1} parent=5 // pred_check
      _
    $region10: #{tpu_custom_call.1} parent=5 // pred_check_branch
      %141 = sbr.rel (%p138) target = $region12
    $region11: #{tpu_custom_call.1} parent=5 // pred_region
      %s142 = ssub.s32 %s9, 1
      // Predicated region
      $region13: #{tpu_custom_call.1} parent=11 // pred_check
        %p143 = pneg %p77
      $region14: #{tpu_custom_call.1} parent=11 // pred_check_branch
        %145 = sbr.rel (%p143) target = $region16
      $region15: #{tpu_custom_call.1} parent=11 // pred_region
        _
      $region16: #{tpu_custom_call.1} parent=11 // pred_fallthru
        _
      // Predicated region
      $region17: #{tpu_custom_call.1} parent=11 // pred_check
        %p146 = pneg %p98
      $region18: #{tpu_custom_call.1} parent=11 // pred_check_branch
        %148 = sbr.rel (%p146) target = $region20
      $region19: #{tpu_custom_call.1} parent=11 // pred_region
        _
      $region20: #{tpu_custom_call.1} parent=11 // pred_fallthru
        _
    $region12: #{tpu_custom_call.1} parent=5 // pred_fallthru
      _
    %p149 = scmp.lt.s32.totalorder %s9, 16
    // Predicated region
    $region21: #{tpu_custom_call.1} parent=5 // pred_check
      %p150 = pneg %p149
    $region22: #{tpu_custom_call.1} parent=5 // pred_check_branch
      %152 = sbr.rel (%p150) target = $region24
    $region23: #{tpu_custom_call.1} parent=5 // pred_region
      // Predicated region
      $region25: #{tpu_custom_call.1} parent=23 // pred_check
        %p153 = pneg %p50
      $region26: #{tpu_custom_call.1} parent=23 // pred_check_branch
        %155 = sbr.rel (%p153) target = $region28
      $region27: #{tpu_custom_call.1} parent=23 // pred_region
        %s156 = smul.u32 8, %s17
        %p157 = scmp.lt.s32.totalorder %s16, 1
        %s158 = scalar_select %p157, %s16, 1
        %p159 = scmp.lt.s32.totalorder %s156, 7
        %s160 = scalar_select %p159, %s156, 7
        %s161 = smul.addr %s158, 80
        %s162 = sadd.s32 %s160, %s161
        %s163 = smul.addr %s162, 8
        %s164 = scalar_lea.vmem %s0, %s163
        %s165 = smul.u32 8, %s17
      $region28: #{tpu_custom_call.1} parent=23 // pred_fallthru
        _
    $region24: #{tpu_custom_call.1} parent=5 // pred_fallthru
      _
    %p166 = scmp.le.s32.totalorder 1, %s9
    %p167 = scmp.lt.s32.totalorder %s9, 17
    %p168 = pnand %p166, %p167
    %p169 = pneg %p168
    // Predicated region
    $region29: #{tpu_custom_call.1} parent=5 // pred_check
      _
    $region30: #{tpu_custom_call.1} parent=5 // pred_check_branch
      %171 = sbr.rel (%p168) target = $region32
    $region31: #{tpu_custom_call.1} parent=5 // pred_region
      %s172 = ssub.s32 %s9, 1
      %s173 = smul.u32 8, %s20
      %p174 = scmp.lt.s32.totalorder %s19, 1
      %s175 = scalar_select %p174, %s19, 1
      %p176 = scmp.lt.s32.totalorder %s173, 7
      %s177 = scalar_select %p176, %s173, 7
      %s178 = smul.addr %s175, 80
      %s179 = sadd.s32 %s177, %s178
      %s180 = smul.addr %s179, 8
      %s181 = scalar_lea.vmem %s0, %s180
      %p182 = pneg %p56
      %p183 = pneg %p53
      %p184 = pneg %p77
      %p185 = pneg %p74
      %p186 = pneg %p98
      %p187 = pneg %p95
      %p188 = pneg %p128
      %p189 = pneg %p125
      %s190 = smul.u32 8, %s20
      %p191 = scmp.lt.s32.totalorder %s19, 1
      %s192 = scalar_select %p191, %s19, 1
      %p193 = scmp.lt.s32.totalorder %s21, 7
      %s194 = scalar_select %p193, %s21, 7
      %p195 = scmp.lt.s32.totalorder %s190, 7
      %s196 = scalar_select %p195, %s190, 7
      %s197 = smul.addr %s194, 8
      %s198 = sadd.s32 %s196, %s197
      %s199 = smul.addr %s192, 64
      %s200 = sadd.s32 %s198, %s199
      %s201 = smul.addr %s200, 8
      %s202 = scalar_lea.vmem %s3, %s201
      %s203 = smul.u32 8, %s20
      %p204 = scmp.lt.s32.totalorder %s19, 1
      %s205 = scalar_select %p204, %s19, 1
      %p206 = scmp.lt.s32.totalorder %s203, 7
      %s207 = scalar_select %p206, %s203, 7
      %s208 = smul.addr %s205, 80
      %s209 = sadd.s32 %s207, %s208
      %s210 = smul.addr %s209, 8
      %s211 = scalar_lea.vmem %s0, %s210
      %s212 = smul.u32 8, %s20
      %s213 = smul.u32 8, %s20
      %p214 = scmp.lt.s32.totalorder %s19, 1
      %s215 = scalar_select %p214, %s19, 1
      %p216 = scmp.lt.s32.totalorder %s21, 7
      %s217 = scalar_select %p216, %s21, 7
      %p218 = scmp.lt.s32.totalorder %s213, 7
      %s219 = scalar_select %p218, %s213, 7
      %s220 = smul.addr %s217, 8
      %s221 = sadd.s32 %s219, %s220
      %s222 = smul.addr %s215, 64
      %s223 = sadd.s32 %s221, %s222
      %s224 = smul.addr %s223, 8
      %s225 = scalar_lea.vmem %s3, %s224
      %s226 = smul.u32 8, %s20
      %s227 = smul.u32 %s21, 64
      %s228 = scalar_lea.vmem %s211, %s227
      %v229 = vld [vmem:[%s228] sm:$0xff]
      %v230 = vld [vmem:[%s228 + $0x8] sm:$0xff]
      %v231 = vld [vmem:[%s228 + $0x10] sm:$0xff]
      %v232 = vld [vmem:[%s228 + $0x18] sm:$0xff]
      %v233 = vld [vmem:[%s228 + $0x20] sm:$0xff]
      %v234 = vld [vmem:[%s228 + $0x28] sm:$0xff]
      %v235 = vld [vmem:[%s228 + $0x30] sm:$0xff]
      %v236 = vld [vmem:[%s228 + $0x38] sm:$0xff]
      %v237 = vld [vmem:[%s1] sm:$0xff]
      %v238 = vld [vmem:[%s1 + $0x8] sm:$0xff]
      %v239 = vld [vmem:[%s1 + $0x10] sm:$0xff]
      %v240 = vld [vmem:[%s1 + $0x18] sm:$0xff]
      %v241 = vld [vmem:[%s1 + $0x20] sm:$0xf]
      %s242 = sadd.s32 %s21, 1
      %s243 = smul.u32 %s242, 64
      %s244 = scalar_lea.vmem %s211, %s243
      %v245 = vld [vmem:[%s244] sm:$0xff]
      %v246 = vld [vmem:[%s244 + $0x8] sm:$0xff]
      %v247 = vld [vmem:[%s244 + $0x10] sm:$0xff]
      %v248 = vld [vmem:[%s244 + $0x18] sm:$0xff]
      %v249 = vld [vmem:[%s244 + $0x20] sm:$0xff]
      %v250 = vld [vmem:[%s244 + $0x28] sm:$0xff]
      %v251 = vld [vmem:[%s244 + $0x30] sm:$0xff]
      %v252 = vld [vmem:[%s244 + $0x38] sm:$0xff]
      %s253 = scalar_lea.vmem %s1, 40
      %v254 = vld [vmem:[%s253] sm:$0xff]
      %v255 = vld [vmem:[%s253 + $0x8] sm:$0xff]
      %v256 = vld [vmem:[%s253 + $0x10] sm:$0xff]
      %v257 = vld [vmem:[%s253 + $0x18] sm:$0xff]
      %v258 = vld [vmem:[%s253 + $0x20] sm:$0xf]
      %vm259 = vcmask 293888
      %v261 = vsel %vm259, %v245, 0
      %v264 = vsel %vm259, %v246, 0
      %v267 = vsel %vm259, %v247, 0
      %v270 = vsel %vm259, %v248, 0
      %v273 = vsel %vm259, %v249, 0
      %v276 = vsel %vm259, %v250, 0
      %v279 = vsel %vm259, %v251, 0
      %v282 = vsel %vm259, %v252, 0
      %vm284 = vcmask 1043456
      %v286 = vsel %vm284, %v258, 0
      %288 = vmatprep.subr.mxu0 0.0
      %289 = vmatpush1.msra.mxu0 %v254
      %290 = vmatprep.subr.mxu0 0.0
      %291 = vmatpush1.msra.mxu0 %v255
      %292 = vmatprep.subr.mxu0 0.0
      %293 = vmatpush1.msra.mxu0 %v256
      %294 = vmatprep.subr.mxu0 0.0
      %295 = vmatpush1.msra.mxu0 %v257
      %296 = vmatprep.subr.mxu0 0.0
      %297 = vmatpush1.msra.mxu0 %v286
      %298 = vmatprep.subr.mxu0 0.0
      %299 = vmatpush1.msra.mxu0 0.0
      %300 = vmatprep.subr.mxu0 0.0
      %301 = vmatpush1.msra.mxu0 0.0
      %302 = vmatprep.subr.mxu0 0.0
      %303 = vmatpush1.msra.mxu0 0.0
      %304 = vmatprep.subr.mxu0 0.0
      %305 = vmatpush1.msra.mxu0 0.0
      %306 = vmatprep.subr.mxu0 0.0
      %307 = vmatpush1.msra.mxu0 0.0
      %308 = vmatprep.subr.mxu0 0.0
      %309 = vmatpush1.msra.mxu0 0.0
      %310 = vmatprep.subr.mxu0 0.0
      %311 = vmatpush1.msra.mxu0 0.0
      %312 = vmatprep.subr.mxu0 0.0
      %313 = vmatpush1.msra.mxu0 0.0
      %314 = vmatprep.subr.mxu0 0.0
      %315 = vmatpush1.msra.mxu0 0.0
      %316 = vmatprep.subr.mxu0 0.0
      %317 = vmatpush1.msra.mxu0 0.0
      %318 = vmatprep.subr.mxu0 0.0
      %319 = vmatpush1.msra.mxu0 0.0
      %320 = vmatprep.subr.mxu0 0.0
      %321 = vmatpush1.msra.mxu0 0.0
      %322 = vmatprep.subr.mxu0 0.0
      %323 = vmatpush1.msra.mxu0 0.0
      %324 = vmatprep.subr.mxu0 0.0
      %325 = vmatpush1.msra.mxu0 0.0
      %326 = vmatprep.subr.mxu0 0.0
      %327 = vmatpush1.msra.mxu0 0.0
      %328 = vmatprep.subr.mxu0 0.0
      %329 = vmatpush1.msra.mxu0 0.0
      %330 = vmatprep.subr.mxu0 0.0
      %331 = vmatpush1.msra.mxu0 0.0
      %332 = vmatprep.subr.mxu0 0.0
      %333 = vmatpush1.msra.mxu0 0.0
      %334 = vmatprep.subr.mxu0 0.0
      %335 = vmatpush1.msra.mxu0 0.0
      %336 = vmatprep.subr.mxu0 0.0
      %337 = vmatpush1.msra.mxu0 0.0
      %338 = vmatprep.subr.mxu0 0.0
      %339 = vmatpush1.msra.mxu0 0.0
      %340 = vmatprep.subr.mxu0 0.0
      %341 = vmatpush1.msra.mxu0 0.0
      %342 = vmatprep.subr.mxu0 0.0
      %343 = vmatpush1.msra.mxu0 0.0
      %344 = vmatprep.subr.mxu0 0.0
      %345 = vmatpush1.msra.mxu0 0.0
      %346 = vmatprep.subr.mxu0 0.0
      %347 = vmatpush1.msra.mxu0 0.0
      %348 = vmatprep.subr.mxu0 0.0
      %349 = vmatpush1.msra.mxu0 0.0
      %350 = vmatprep.subr.mxu0 0.0
      %351 = vmatpush1.msra.mxu0 0.0
      %352 = vmatprep.mubr.f32.mxu0 0.0
      %353 = vmatmul.mubr.f32.gmra.mrb[0].mxu0 %v261
      %v354 = vpop.f32.mrb[0].mxu0
      %v355 = vadd.f32 0.0, %v354
      %v356 = vpop.f32.mrb[0].mxu0
      %357 = vmatprep.mubr.f32.mxu0 0.0
      %358 = vmatmul.mubr.f32.gmra.mrb[0].mxu0 %v264
      %v359 = vpop.f32.mrb[0].mxu0
      %v360 = vadd.f32 0.0, %v359
      %v361 = vpop.f32.mrb[0].mxu0
      %362 = vmatprep.mubr.f32.mxu0 0.0
      %363 = vmatmul.mubr.f32.gmra.mrb[0].mxu0 %v267
      %v364 = vpop.f32.mrb[0].mxu0
      %v365 = vadd.f32 0.0, %v364
      %v366 = vpop.f32.mrb[0].mxu0
      %367 = vmatprep.mubr.f32.mxu0 0.0
      %368 = vmatmul.mubr.f32.gmra.mrb[0].mxu0 %v270
      %v369 = vpop.f32.mrb[0].mxu0
      %v370 = vadd.f32 0.0, %v369
      %v371 = vpop.f32.mrb[0].mxu0
      %372 = vmatprep.mubr.f32.mxu0 0.0
      %373 = vmatmul.mubr.f32.gmra.mrb[0].mxu0 %v273
      %v374 = vpop.f32.mrb[0].mxu0
      %v375 = vadd.f32 0.0, %v374
      %v376 = vpop.f32.mrb[0].mxu0
      %377 = vmatprep.mubr.f32.mxu0 0.0
      %378 = vmatmul.mubr.f32.gmra.mrb[0].mxu0 %v276
      %v379 = vpop.f32.mrb[0].mxu0
      %v380 = vadd.f32 0.0, %v379
      %v381 = vpop.f32.mrb[0].mxu0
      %382 = vmatprep.mubr.f32.mxu0 0.0
      %383 = vmatmul.mubr.f32.gmra.mrb[0].mxu0 %v279
      %v384 = vpop.f32.mrb[0].mxu0
      %v385 = vadd.f32 0.0, %v384
      %v386 = vpop.f32.mrb[0].mxu0
      %387 = vmatprep.mubr.f32.mxu0 0.0
      %388 = vmatmul.mubr.f32.gmra.mrb[0].mxu0 %v282
      %v389 = vpop.f32.mrb[0].mxu0
      %v390 = vadd.f32 0.0, %v389
      %v391 = vpop.f32.mrb[0].mxu0
      %392 = vdwg.mxu0
      %v394 = vsel %vm259, %v229, 0
      %v397 = vsel %vm259, %v230, 0
      %v400 = vsel %vm259, %v231, 0
      %v403 = vsel %vm259, %v232, 0
      %v406 = vsel %vm259, %v233, 0
      %v409 = vsel %vm259, %v234, 0
      %v412 = vsel %vm259, %v235, 0
      %v415 = vsel %vm259, %v236, 0
      %v418 = vsel %vm284, %v241, 0
      %420 = vmatprep.subr.mxu0 0.0
      %421 = vmatpush1.msra.mxu0 %v237
      %422 = vmatprep.subr.mxu0 0.0
      %423 = vmatpush1.msra.mxu0 %v238
      %424 = vmatprep.subr.mxu0 0.0
      %425 = vmatpush1.msra.mxu0 %v239
      %426 = vmatprep.subr.mxu0 0.0
      %427 = vmatpush1.msra.mxu0 %v240
      %428 = vmatprep.subr.mxu0 0.0
      %429 = vmatpush1.msra.mxu0 %v418
      %430 = vmatprep.subr.mxu0 0.0
      %431 = vmatpush1.msra.mxu0 0.0
      %432 = vmatprep.subr.mxu0 0.0
      %433 = vmatpush1.msra.mxu0 0.0
      %434 = vmatprep.subr.mxu0 0.0
      %435 = vmatpush1.msra.mxu0 0.0
      %436 = vmatprep.subr.mxu0 0.0
      %437 = vmatpush1.msra.mxu0 0.0
      %438 = vmatprep.subr.mxu0 0.0
      %439 = vmatpush1.msra.mxu0 0.0
      %440 = vmatprep.subr.mxu0 0.0
      %441 = vmatpush1.msra.mxu0 0.0
      %442 = vmatprep.subr.mxu0 0.0
      %443 = vmatpush1.msra.mxu0 0.0
      %444 = vmatprep.subr.mxu0 0.0
      %445 = vmatpush1.msra.mxu0 0.0
      %446 = vmatprep.subr.mxu0 0.0
      %447 = vmatpush1.msra.mxu0 0.0
      %448 = vmatprep.subr.mxu0 0.0
      %449 = vmatpush1.msra.mxu0 0.0
      %450 = vmatprep.subr.mxu0 0.0
      %451 = vmatpush1.msra.mxu0 0.0
      %452 = vmatprep.subr.mxu0 0.0
      %453 = vmatpush1.msra.mxu0 0.0
      %454 = vmatprep.subr.mxu0 0.0
      %455 = vmatpush1.msra.mxu0 0.0
      %456 = vmatprep.subr.mxu0 0.0
      %457 = vmatpush1.msra.mxu0 0.0
      %458 = vmatprep.subr.mxu0 0.0
      %459 = vmatpush1.msra.mxu0 0.0
      %460 = vmatprep.subr.mxu0 0.0
      %461 = vmatpush1.msra.mxu0 0.0
      %462 = vmatprep.subr.mxu0 0.0
      %463 = vmatpush1.msra.mxu0 0.0
      %464 = vmatprep.subr.mxu0 0.0
      %465 = vmatpush1.msra.mxu0 0.0
      %466 = vmatprep.subr.mxu0 0.0
      %467 = vmatpush1.msra.mxu0 0.0
      %468 = vmatprep.subr.mxu0 0.0
      %469 = vmatpush1.msra.mxu0 0.0
      %470 = vmatprep.subr.mxu0 0.0
      %471 = vmatpush1.msra.mxu0 0.0
      %472 = vmatprep.subr.mxu0 0.0
      %473 = vmatpush1.msra.mxu0 0.0
      %474 = vmatprep.subr.mxu0 0.0
      %475 = vmatpush1.msra.mxu0 0.0
      %476 = vmatprep.subr.mxu0 0.0
      %477 = vmatpush1.msra.mxu0 0.0
      %478 = vmatprep.subr.mxu0 0.0
      %479 = vmatpush1.msra.mxu0 0.0
      %480 = vmatprep.subr.mxu0 0.0
      %481 = vmatpush1.msra.mxu0 0.0
      %482 = vmatprep.subr.mxu0 0.0
      %483 = vmatpush1.msra.mxu0 0.0
      %484 = vmatprep.mubr.f32.mxu0 0.0
      %485 = vmatmul.mubr.f32.gmra.mrb[0].mxu0 %v394
      %v486 = vpop.f32.mrb[0].mxu0
      %v487 = vadd.f32 %v355, %v486
      %v488 = vpop.f32.mrb[0].mxu0
      %489 = vmatprep.mubr.f32.mxu0 0.0
      %490 = vmatmul.mubr.f32.gmra.mrb[0].mxu0 %v397
      %v491 = vpop.f32.mrb[0].mxu0
      %v492 = vadd.f32 %v360, %v491
      %v493 = vpop.f32.mrb[0].mxu0
      %494 = vmatprep.mubr.f32.mxu0 0.0
      %495 = vmatmul.mubr.f32.gmra.mrb[0].mxu0 %v400
      %v496 = vpop.f32.mrb[0].mxu0
      %v497 = vadd.f32 %v365, %v496
      %v498 = vpop.f32.mrb[0].mxu0
      %499 = vmatprep.mubr.f32.mxu0 0.0
      %500 = vmatmul.mubr.f32.gmra.mrb[0].mxu0 %v403
      %v501 = vpop.f32.mrb[0].mxu0
      %v502 = vadd.f32 %v370, %v501
      %v503 = vpop.f32.mrb[0].mxu0
      %504 = vmatprep.mubr.f32.mxu0 0.0
      %505 = vmatmul.mubr.f32.gmra.mrb[0].mxu0 %v406
      %v506 = vpop.f32.mrb[0].mxu0
      %v507 = vadd.f32 %v375, %v506
      %v508 = vpop.f32.mrb[0].mxu0
      %509 = vmatprep.mubr.f32.mxu0 0.0
      %510 = vmatmul.mubr.f32.gmra.mrb[0].mxu0 %v409
      %v511 = vpop.f32.mrb[0].mxu0
      %v512 = vadd.f32 %v380, %v511
      %v513 = vpop.f32.mrb[0].mxu0
      %514 = vmatprep.mubr.f32.mxu0 0.0
      %515 = vmatmul.mubr.f32.gmra.mrb[0].mxu0 %v412
      %v516 = vpop.f32.mrb[0].mxu0
      %v517 = vadd.f32 %v385, %v516
      %v518 = vpop.f32.mrb[0].mxu0
      %519 = vmatprep.mubr.f32.mxu0 0.0
      %520 = vmatmul.mubr.f32.gmra.mrb[0].mxu0 %v415
      %v521 = vpop.f32.mrb[0].mxu0
      %v522 = vadd.f32 %v390, %v521
      %v523 = vpop.f32.mrb[0].mxu0
      %524 = vdwg.mxu0
      %s525 = sadd.s32 %s21, 2
      %s526 = smul.u32 %s525, 64
      %s527 = scalar_lea.vmem %s211, %s526
      %v528 = vld [vmem:[%s527] sm:$0xff]
      %v529 = vld [vmem:[%s527 + $0x8] sm:$0xff]
      %v530 = vld [vmem:[%s527 + $0x10] sm:$0xff]
      %v531 = vld [vmem:[%s527 + $0x18] sm:$0xff]
      %v532 = vld [vmem:[%s527 + $0x20] sm:$0xff]
      %v533 = vld [vmem:[%s527 + $0x28] sm:$0xff]
      %v534 = vld [vmem:[%s527 + $0x30] sm:$0xff]
      %v535 = vld [vmem:[%s527 + $0x38] sm:$0xff]
      %s536 = scalar_lea.vmem %s1, 80
      %v537 = vld [vmem:[%s536] sm:$0xff]
      %v538 = vld [vmem:[%s536 + $0x8] sm:$0xff]
      %v539 = vld [vmem:[%s536 + $0x10] sm:$0xff]
      %v540 = vld [vmem:[%s536 + $0x18] sm:$0xff]
      %v541 = vld [vmem:[%s536 + $0x20] sm:$0xf]
      %v543 = vsel %vm259, %v528, 0
      %v546 = vsel %vm259, %v529, 0
      %v549 = vsel %vm259, %v530, 0
      %v552 = vsel %vm259, %v531, 0
      %v555 = vsel %vm259, %v532, 0
      %v558 = vsel %vm259, %v533, 0
      %v561 = vsel %vm259, %v534, 0
      %v564 = vsel %vm259, %v535, 0
      %v567 = vsel %vm284, %v541, 0
      %569 = vmatprep.subr.mxu0 0.0
      %570 = vmatpush1.msra.mxu0 %v537
      %571 = vmatprep.subr.mxu0 0.0
      %572 = vmatpush1.msra.mxu0 %v538
      %573 = vmatprep.subr.mxu0 0.0
      %574 = vmatpush1.msra.mxu0 %v539
      %575 = vmatprep.subr.mxu0 0.0
      %576 = vmatpush1.msra.mxu0 %v540
      %577 = vmatprep.subr.mxu0 0.0
      %578 = vmatpush1.msra.mxu0 %v567
      %579 = vmatprep.subr.mxu0 0.0
      %580 = vmatpush1.msra.mxu0 0.0
      %581 = vmatprep.subr.mxu0 0.0
      %582 = vmatpush1.msra.mxu0 0.0
      %583 = vmatprep.subr.mxu0 0.0
      %584 = vmatpush1.msra.mxu0 0.0
      %585 = vmatprep.subr.mxu0 0.0
      %586 = vmatpush1.msra.mxu0 0.0
      %587 = vmatprep.subr.mxu0 0.0
      %588 = vmatpush1.msra.mxu0 0.0
      %589 = vmatprep.subr.mxu0 0.0
      %590 = vmatpush1.msra.mxu0 0.0
      %591 = vmatprep.subr.mxu0 0.0
      %592 = vmatpush1.msra.mxu0 0.0
      %593 = vmatprep.subr.mxu0 0.0
      %594 = vmatpush1.msra.mxu0 0.0
      %595 = vmatprep.subr.mxu0 0.0
      %596 = vmatpush1.msra.mxu0 0.0
      %597 = vmatprep.subr.mxu0 0.0
      %598 = vmatpush1.msra.mxu0 0.0
      %599 = vmatprep.subr.mxu0 0.0
      %600 = vmatpush1.msra.mxu0 0.0
      %601 = vmatprep.subr.mxu0 0.0
      %602 = vmatpush1.msra.mxu0 0.0
      %603 = vmatprep.subr.mxu0 0.0
      %604 = vmatpush1.msra.mxu0 0.0
      %605 = vmatprep.subr.mxu0 0.0
      %606 = vmatpush1.msra.mxu0 0.0
      %607 = vmatprep.subr.mxu0 0.0
      %608 = vmatpush1.msra.mxu0 0.0
      %609 = vmatprep.subr.mxu0 0.0
      %610 = vmatpush1.msra.mxu0 0.0
      %611 = vmatprep.subr.mxu0 0.0
      %612 = vmatpush1.msra.mxu0 0.0
      %613 = vmatprep.subr.mxu0 0.0
      %614 = vmatpush1.msra.mxu0 0.0
      %615 = vmatprep.subr.mxu0 0.0
      %616 = vmatpush1.msra.mxu0 0.0
      %617 = vmatprep.subr.mxu0 0.0
      %618 = vmatpush1.msra.mxu0 0.0
      %619 = vmatprep.subr.mxu0 0.0
      %620 = vmatpush1.msra.mxu0 0.0
      %621 = vmatprep.subr.mxu0 0.0
      %622 = vmatpush1.msra.mxu0 0.0
      %623 = vmatprep.subr.mxu0 0.0
      %624 = vmatpush1.msra.mxu0 0.0
      %625 = vmatprep.subr.mxu0 0.0
      %626 = vmatpush1.msra.mxu0 0.0
      %627 = vmatprep.subr.mxu0 0.0
      %628 = vmatpush1.msra.mxu0 0.0
      %629 = vmatprep.subr.mxu0 0.0
      %630 = vmatpush1.msra.mxu0 0.0
      %631 = vmatprep.subr.mxu0 0.0
      %632 = vmatpush1.msra.mxu0 0.0
      %633 = vmatprep.mubr.f32.mxu0 0.0
      %634 = vmatmul.mubr.f32.gmra.mrb[0].mxu0 %v543
      %v635 = vpop.f32.mrb[0].mxu0
      %v636 = vadd.f32 0.0, %v635
      %v637 = vpop.f32.mrb[0].mxu0
      %638 = vmatprep.mubr.f32.mxu0 0.0
      %639 = vmatmul.mubr.f32.gmra.mrb[0].mxu0 %v546
      %v640 = vpop.f32.mrb[0].mxu0
      %v641 = vadd.f32 0.0, %v640
      %v642 = vpop.f32.mrb[0].mxu0
      %643 = vmatprep.mubr.f32.mxu0 0.0
      %644 = vmatmul.mubr.f32.gmra.mrb[0].mxu0 %v549
      %v645 = vpop.f32.mrb[0].mxu0
      %v646 = vadd.f32 0.0, %v645
      %v647 = vpop.f32.mrb[0].mxu0
      %648 = vmatprep.mubr.f32.mxu0 0.0
      %649 = vmatmul.mubr.f32.gmra.mrb[0].mxu0 %v552
      %v650 = vpop.f32.mrb[0].mxu0
      %v651 = vadd.f32 0.0, %v650
      %v652 = vpop.f32.mrb[0].mxu0
      %653 = vmatprep.mubr.f32.mxu0 0.0
      %654 = vmatmul.mubr.f32.gmra.mrb[0].mxu0 %v555
      %v655 = vpop.f32.mrb[0].mxu0
      %v656 = vadd.f32 0.0, %v655
      %v657 = vpop.f32.mrb[0].mxu0
      %658 = vmatprep.mubr.f32.mxu0 0.0
      %659 = vmatmul.mubr.f32.gmra.mrb[0].mxu0 %v558
      %v660 = vpop.f32.mrb[0].mxu0
      %v661 = vadd.f32 0.0, %v660
      %v662 = vpop.f32.mrb[0].mxu0
      %663 = vmatprep.mubr.f32.mxu0 0.0
      %664 = vmatmul.mubr.f32.gmra.mrb[0].mxu0 %v561
      %v665 = vpop.f32.mrb[0].mxu0
      %v666 = vadd.f32 0.0, %v665
      %v667 = vpop.f32.mrb[0].mxu0
      %668 = vmatprep.mubr.f32.mxu0 0.0
      %669 = vmatmul.mubr.f32.gmra.mrb[0].mxu0 %v564
      %v670 = vpop.f32.mrb[0].mxu0
      %v671 = vadd.f32 0.0, %v670
      %v672 = vpop.f32.mrb[0].mxu0
      %673 = vdwg.mxu0
      %v674 = vadd.f32 %v487, %v636
      %v675 = vadd.f32 %v492, %v641
      %v676 = vadd.f32 %v497, %v646
      %v677 = vadd.f32 %v502, %v651
      %v678 = vadd.f32 %v507, %v656
      %v679 = vadd.f32 %v512, %v661
      %v680 = vadd.f32 %v517, %v666
      %v681 = vadd.f32 %v522, %v671
      %v682 = vld [vmem:[%s2] sm:$0x1]
      %v684 = vlaneseq
      %v685 = vshrl.u32 %v684, 7
      %v686 = vsub.s32 0, %v685
      %v687 = vrot.slane %v682, %v686
      %v689 = vadd.f32 %v674, %v687
      %v690 = vadd.f32 %v675, %v687
      %v691 = vadd.f32 %v676, %v687
      %v692 = vadd.f32 %v677, %v687
      %v693 = vadd.f32 %v678, %v687
      %v694 = vadd.f32 %v679, %v687
      %v695 = vadd.f32 %v680, %v687
      %v696 = vadd.f32 %v681, %v687
      %vm697 = vcmask 31744
      %698 = vst.msk [vmem:[%s225] sm:$0xff] %vm697, %v689
      %699 = vst.msk [vmem:[%s225 + $0x8] sm:$0xff] %vm697, %v690
      %700 = vst.msk [vmem:[%s225 + $0x10] sm:$0xff] %vm697, %v691
      %701 = vst.msk [vmem:[%s225 + $0x18] sm:$0xff] %vm697, %v692
      %702 = vst.msk [vmem:[%s225 + $0x20] sm:$0xff] %vm697, %v693
      %703 = vst.msk [vmem:[%s225 + $0x28] sm:$0xff] %vm697, %v694
      %704 = vst.msk [vmem:[%s225 + $0x30] sm:$0xff] %vm697, %v695
      %705 = vst.msk [vmem:[%s225 + $0x38] sm:$0xff] %vm697, %v696
      %s706 = smul.u32 8, %s20
      %p707 = scmp.lt.s32.totalorder %s19, 1
      %s708 = scalar_select %p707, %s19, 1
      %p709 = scmp.lt.s32.totalorder %s21, 7
      %s710 = scalar_select %p709, %s21, 7
      %p711 = scmp.lt.s32.totalorder %s706, 7
      %s712 = scalar_select %p711, %s706, 7
      %s713 = smul.addr %s710, 8
      %s714 = sadd.s32 %s712, %s713
      %s715 = smul.addr %s708, 64
      %s716 = sadd.s32 %s714, %s715
      %s717 = smul.addr %s716, 8
      %s718 = scalar_lea.vmem %s3, %s717
      // Predicated region
      $region33: #{tpu_custom_call.1} parent=31 // pred_check
        %p719 = pneg %p125
      $region34: #{tpu_custom_call.1} parent=31 // pred_check_branch
        %721 = sbr.rel (%p719) target = $region36
      $region35: #{tpu_custom_call.1} parent=31 // pred_region
        %s722 = smul.u32 8, %s20
      $region36: #{tpu_custom_call.1} parent=31 // pred_fallthru
        _
    $region32: #{tpu_custom_call.1} parent=5 // pred_fallthru
      _
    %p723 = scmp.le.s32.totalorder 2, %s9
    // Predicated region
    $region37: #{tpu_custom_call.1} parent=5 // pred_check
      %p724 = pneg %p723
    $region38: #{tpu_custom_call.1} parent=5 // pred_check_branch
      %726 = sbr.rel (%p724) target = $region40
    $region39: #{tpu_custom_call.1} parent=5 // pred_region
      %s727 = ssub.s32 %s9, 2
      // Predicated region
      $region41: #{tpu_custom_call.1} parent=39 // pred_check
        %p728 = pneg %p131
      $region42: #{tpu_custom_call.1} parent=39 // pred_check_branch
        %730 = sbr.rel (%p728) target = $region44
      $region43: #{tpu_custom_call.1} parent=39 // pred_region
        %s731 = smul.u32 8, %s23
        %p732 = scmp.lt.s32.totalorder %s22, 1
        %s733 = scalar_select %p732, %s22, 1
        %p734 = scmp.lt.s32.totalorder %s24, 7
        %s735 = scalar_select %p734, %s24, 7
        %p736 = scmp.lt.s32.totalorder %s731, 7
        %s737 = scalar_select %p736, %s731, 7
        %s738 = smul.addr %s735, 8
        %s739 = sadd.s32 %s737, %s738
        %s740 = smul.addr %s733, 64
        %s741 = sadd.s32 %s739, %s740
        %s742 = smul.addr %s741, 8
        %s743 = scalar_lea.vmem %s3, %s742
      $region44: #{tpu_custom_call.1} parent=39 // pred_fallthru
        _
    $region40: #{tpu_custom_call.1} parent=5 // pred_fallthru
      _
  $region6: #{tpu_custom_call.1} parent=0 // loop_footer
    %s13 = sadd.s32 1, %s9
  $region7: #{tpu_custom_call.1} parent=0 // loop_footer_branch
    %8 = sbr.rel target = $region3
  $region8: #{tpu_custom_call.1} parent=0 // loop_exit
    _

</llo_original>
